<compile_context>
chip_gen: v7x
topology: tpu7x:2x2x1
jax: 0.10.0
libtpu: 0.0.40
codegen_flags: <defaults>
</compile_context>

<pallas_src>
import jax
import jax.numpy as jnp
from jax.experimental import pallas as pl
from jax.experimental.pallas import tpu as pltpu


def _round_up(n, m):
    return ((n + m - 1) // m) * m


def _stable_softplus(x):
    # log(1 + exp(x)) without overflow for large x.
    return jnp.maximum(x, 0.0) + jnp.log1p(jnp.exp(-jnp.abs(x)))


def make_bayesnet_kernel(num_layers, dp, out_dim):
    """Kernel refs: x (B, dp), params (L, 2*dp+8, dp), eps (1, L, dp+8, dp),
    out (1, B, out_dim).  All feature dims are zero-padded to dp."""

    def kernel(x_ref, p_ref, e_ref, o_ref):
        h = x_ref[...].astype(jnp.float32)  # (B, dp)
        for l in range(num_layers):
            # Static sublane-aligned slices out of the packed slabs.
            w_mu = p_ref[l, 0:dp, :]
            w_rho = p_ref[l, dp : 2 * dp, :]
            b_mu = p_ref[l, 2 * dp : 2 * dp + 1, :]
            b_rho = p_ref[l, 2 * dp + 1 : 2 * dp + 2, :]
            w_eps = e_ref[0, l, 0:dp, :]
            b_eps = e_ref[0, l, dp : dp + 1, :]

            # Gaussian.sample(): mu + eps * softplus(rho)
            w = w_mu + w_eps * _stable_softplus(w_rho)
            b = b_mu + b_eps * _stable_softplus(b_rho)  # (1, dp) broadcasts

            # Layer.forward: relu(x @ W + b)
            h = jnp.maximum(
                jnp.dot(h, w, preferred_element_type=jnp.float32) + b, 0.0
            )

        # F.log_softmax over the real (un-padded) output columns.
        logits = h[:, 0:out_dim]
        m = jnp.max(logits, axis=-1, keepdims=True)
        z = logits - m
        lse = jnp.log(jnp.sum(jnp.exp(z), axis=-1, keepdims=True))
        o_ref[0, :, :] = (z - lse).astype(o_ref.dtype)

    return kernel


def pack_params(params, dp):
    """params: list of (w_mu, w_rho, b_mu, b_rho) -> slab (L, 2*dp+8, dp)."""
    nl = len(params)
    slab = jnp.zeros((nl, 2 * dp + 8, dp), jnp.float32)
    for l, (w_mu, w_rho, b_mu, b_rho) in enumerate(params):
        d_in, d_out = w_mu.shape
        slab = slab.at[l, 0:d_in, 0:d_out].set(w_mu)
        slab = slab.at[l, dp : dp + d_in, 0:d_out].set(w_rho)
        slab = slab.at[l, 2 * dp, 0:d_out].set(b_mu)
        slab = slab.at[l, 2 * dp + 1, 0:d_out].set(b_rho)
    return slab


def pack_eps(eps_samples, dp):
    """eps_samples: [samples][layers] of (w_eps, b_eps) -> (S, L, dp+8, dp)."""
    S = len(eps_samples)
    nl = len(eps_samples[0])
    slab = jnp.zeros((S, nl, dp + 8, dp), jnp.float32)
    for s, layers in enumerate(eps_samples):
        for l, (w_eps, b_eps) in enumerate(layers):
            d_in, d_out = w_eps.shape
            slab = slab.at[s, l, 0:d_in, 0:d_out].set(w_eps)
            slab = slab.at[s, l, dp, 0:d_out].set(b_eps)
    return slab


def bayesnet_forward(x, params, eps_samples):
    """x: (B, D_in).  params: list of (w_mu, w_rho, b_mu, b_rho).
       eps_samples: list (length S) of per-layer (w_eps, b_eps) noise.
       Returns (S, B, output_size) log-probabilities (one forward per sample)."""
    num_layers = len(params)
    out_dim = params[-1][0].shape[1]
    batch, in_dim = x.shape
    S = len(eps_samples)

    # Uniform padded feature width (sublane-aligned) shared by every layer.
    dims = [in_dim] + [p[0].shape[1] for p in params]
    dp = _round_up(max(dims), 8)

    x_p = jnp.zeros((batch, dp), jnp.float32).at[:, :in_dim].set(
        x.astype(jnp.float32)
    )
    p_slab = pack_params(params, dp)
    e_slab = pack_eps(eps_samples, dp)

    kernel = make_bayesnet_kernel(num_layers, dp, out_dim)

    return pl.pallas_call(
        kernel,
        out_shape=jax.ShapeDtypeStruct((S, batch, out_dim), jnp.float32),
        grid=(S,),
        in_specs=[
            # Shared across samples: constant block index, fetched once.
            pl.BlockSpec((batch, dp), lambda s: (0, 0)),
            pl.BlockSpec((num_layers, 2 * dp + 8, dp), lambda s: (0, 0, 0)),
            # Per-sample reparameterization noise.
            pl.BlockSpec((1, num_layers, dp + 8, dp), lambda s: (s, 0, 0, 0)),
        ],
        out_specs=pl.BlockSpec((1, batch, out_dim), lambda s: (s, 0, 0)),
        compiler_params=pltpu.CompilerParams(
            dimension_semantics=("parallel",)  # v7x: split samples across TCs
        ),
    )(x_p, p_slab, e_slab)


def bayesnet_reference(x, params, eps_layers):
    """Pure-JAX reference of one forward pass (one noise sample)."""
    h = x.astype(jnp.float32)
    for (w_mu, w_rho, b_mu, b_rho), (w_eps, b_eps) in zip(params, eps_layers):
        w = w_mu + w_eps * jnp.log1p(jnp.exp(w_rho))
        b = b_mu + b_eps * jnp.log1p(jnp.exp(b_rho))
        h = jnp.maximum(h @ w + b, 0.0)
    return jax.nn.log_softmax(h, axis=-1)


if __name__ == "__main__":
    # args: input_size=32, hidden_size=32, output_size=16, num_layers=3
    # (layer sizes: in->hidden, hidden->hidden, hidden->out)
    batch = 8
    input_size = 32
    hidden_size = 32
    output_size = 16
    num_layers = 3
    num_samples = 4  # Monte-Carlo samples fused into one pallas_call

    dims = [input_size] + [hidden_size] * (num_layers - 1) + [output_size]

    key = jax.random.PRNGKey(0)
    key, xkey = jax.random.split(key)
    x = jax.random.normal(xkey, (batch, input_size), dtype=jnp.float32)

    params = []
    for l in range(num_layers):
        d_in, d_out = dims[l], dims[l + 1]
        key, k1, k2, k3, k4 = jax.random.split(key, 5)
        # Matches PyTorch Layer.__init__ init ranges.
        w_mu = jax.random.uniform(k1, (d_in, d_out), jnp.float32, -0.2, 0.2)
        w_rho = jax.random.uniform(k2, (d_in, d_out), jnp.float32, -5.0, -4.0)
        b_mu = jax.random.uniform(k3, (d_out,), jnp.float32, -0.2, 0.2)
        b_rho = jax.random.uniform(k4, (d_out,), jnp.float32, -5.0, -4.0)
        params.append((w_mu, w_rho, b_mu, b_rho))

    # Deterministic reparameterization noise (torch.randn_like analogue),
    # one independent draw per Monte-Carlo sample.
    eps_samples = []
    for s in range(num_samples):
        layers = []
        for l in range(num_layers):
            d_in, d_out = dims[l], dims[l + 1]
            key, k1, k2 = jax.random.split(key, 3)
            layers.append(
                (
                    jax.random.normal(k1, (d_in, d_out), jnp.float32),
                    jax.random.normal(k2, (d_out,), jnp.float32),
                )
            )
        eps_samples.append(layers)

    out = bayesnet_forward(x, params, eps_samples)
    out = jax.block_until_ready(out)
    assert out.shape == (num_samples, batch, output_size)

    for s in range(num_samples):
        ref = bayesnet_reference(x, params, eps_samples[s])
        assert jnp.allclose(out[s], ref, atol=1e-5, rtol=1e-5), (
            f"mismatch vs reference at sample {s}"
        )
        # log_softmax rows should exponentiate-sum to 1.
        assert jnp.allclose(jnp.sum(jnp.exp(out[s]), axis=-1), 1.0, atol=1e-4)

    # TODO(synk): training-time scalars (log_prior / log_variational_posterior
    # mixture-Gaussian reductions and the sample_elbo loss) are eval-path
    # no-ops in forward() and are not computed here.

    print("KERNEL_OK")
</pallas_src>

<mosaic_0001>
module attributes {stable_mosaic.version = 11 : i64} {
  func.func @kernel(%arg0: i32, %arg1: memref<8x32xf32, #tpu.memory_space<vmem>>, %arg2: memref<3x72x32xf32, #tpu.memory_space<vmem>>, %arg3: memref<1x3x40x32xf32, #tpu.memory_space<vmem>>, %arg4: memref<1x8x16xf32, #tpu.memory_space<vmem>>) attributes {dimension_semantics = [#tpu.dimension_semantics<parallel>], iteration_bounds = array<i64: 4>, scalar_prefetch = 0 : i64, scratch_operands = 0 : i64, tpu.core_type = #tpu.core_type<tc>, window_params = [{pipeline_mode = #tpu.pipeline_mode<synchronous>, transform_indices = @transform_0, window_bounds = array<i64: 8, 32>}, {pipeline_mode = #tpu.pipeline_mode<synchronous>, transform_indices = @transform_1, window_bounds = array<i64: 3, 72, 32>}, {transform_indices = @transform_2, window_bounds = array<i64: 1, 3, 40, 32>}, {transform_indices = @transform_3, window_bounds = array<i64: 1, 8, 16>}]} {
    %c0 = arith.constant 0 : index
    %c0_0 = arith.constant 0 : index
    %0 = vector.load %arg1[%c0, %c0_0] : memref<8x32xf32, #tpu.memory_space<vmem>>, vector<8x32xf32>
    %c0_1 = arith.constant 0 : index
    %c0_2 = arith.constant 0 : index
    %c0_3 = arith.constant 0 : index
    %1 = vector.load %arg2[%c0_1, %c0_2, %c0_3] : memref<3x72x32xf32, #tpu.memory_space<vmem>>, vector<1x32x32xf32>
    %2 = vector.shape_cast %1 : vector<1x32x32xf32> to vector<32x32xf32>
    %c0_4 = arith.constant 0 : index
    %c32 = arith.constant 32 : index
    %c0_5 = arith.constant 0 : index
    %3 = vector.load %arg2[%c0_4, %c32, %c0_5] : memref<3x72x32xf32, #tpu.memory_space<vmem>>, vector<1x32x32xf32>
    %4 = vector.shape_cast %3 : vector<1x32x32xf32> to vector<32x32xf32>
    %c0_6 = arith.constant 0 : index
    %c64 = arith.constant 64 : index
    %c0_7 = arith.constant 0 : index
    %5 = vector.load %arg2[%c0_6, %c64, %c0_7] : memref<3x72x32xf32, #tpu.memory_space<vmem>>, vector<1x1x32xf32>
    %6 = vector.shape_cast %5 : vector<1x1x32xf32> to vector<1x32xf32>
    %c0_8 = arith.constant 0 : index
    %c65 = arith.constant 65 : index
    %c0_9 = arith.constant 0 : index
    %7 = vector.load %arg2[%c0_8, %c65, %c0_9] : memref<3x72x32xf32, #tpu.memory_space<vmem>>, vector<1x1x32xf32>
    %8 = vector.shape_cast %7 : vector<1x1x32xf32> to vector<1x32xf32>
    %c0_10 = arith.constant 0 : index
    %c0_11 = arith.constant 0 : index
    %c0_12 = arith.constant 0 : index
    %c0_13 = arith.constant 0 : index
    %9 = vector.load %arg3[%c0_10, %c0_11, %c0_12, %c0_13] : memref<1x3x40x32xf32, #tpu.memory_space<vmem>>, vector<1x1x32x32xf32>
    %10 = vector.shape_cast %9 : vector<1x1x32x32xf32> to vector<32x32xf32>
    %c0_14 = arith.constant 0 : index
    %c0_15 = arith.constant 0 : index
    %c32_16 = arith.constant 32 : index
    %c0_17 = arith.constant 0 : index
    %11 = vector.load %arg3[%c0_14, %c0_15, %c32_16, %c0_17] : memref<1x3x40x32xf32, #tpu.memory_space<vmem>>, vector<1x1x1x32xf32>
    %12 = vector.shape_cast %11 : vector<1x1x1x32xf32> to vector<1x32xf32>
    %cst = arith.constant 0.000000e+00 : f32
    %13 = vector.broadcast %cst : f32 to vector<32x32xf32>
    %14 = arith.maximumf %4, %13 : vector<32x32xf32>
    %15 = math.absf %4 : vector<32x32xf32>
    %cst_18 = arith.constant 0.000000e+00 : f32
    %16 = vector.broadcast %cst_18 : f32 to vector<32x32xf32>
    %17 = arith.subf %16, %15 : vector<32x32xf32>
    %18 = math.exp %17 : vector<32x32xf32>
    %19 = math.log1p %18 : vector<32x32xf32>
    %20 = arith.addf %14, %19 : vector<32x32xf32>
    %21 = arith.mulf %10, %20 : vector<32x32xf32>
    %22 = arith.addf %2, %21 : vector<32x32xf32>
    %cst_19 = arith.constant 0.000000e+00 : f32
    %23 = vector.broadcast %cst_19 : f32 to vector<1x32xf32>
    %24 = arith.maximumf %8, %23 : vector<1x32xf32>
    %25 = math.absf %8 : vector<1x32xf32>
    %cst_20 = arith.constant 0.000000e+00 : f32
    %26 = vector.broadcast %cst_20 : f32 to vector<1x32xf32>
    %27 = arith.subf %26, %25 : vector<1x32xf32>
    %28 = math.exp %27 : vector<1x32xf32>
    %29 = math.log1p %28 : vector<1x32xf32>
    %30 = arith.addf %24, %29 : vector<1x32xf32>
    %31 = arith.mulf %12, %30 : vector<1x32xf32>
    %32 = arith.addf %6, %31 : vector<1x32xf32>
    %cst_21 = arith.constant dense<0.000000e+00> : vector<8x32xf32>
    %33 = tpu.matmul %0, %22, %cst_21 {dimension_numbers = #tpu.dot_dimension_numbers<[1], [0], [0], [1], [0, 0, 1, 1], [], []>} : vector<8x32xf32>, vector<32x32xf32>, vector<8x32xf32> -> vector<8x32xf32>
    %34 = vector.broadcast %32 : vector<1x32xf32> to vector<8x32xf32>
    %35 = arith.addf %33, %34 : vector<8x32xf32>
    %cst_22 = arith.constant 0.000000e+00 : f32
    %36 = vector.broadcast %cst_22 : f32 to vector<8x32xf32>
    %37 = arith.maximumf %35, %36 : vector<8x32xf32>
    %c1 = arith.constant 1 : index
    %c0_23 = arith.constant 0 : index
    %c0_24 = arith.constant 0 : index
    %38 = vector.load %arg2[%c1, %c0_23, %c0_24] : memref<3x72x32xf32, #tpu.memory_space<vmem>>, vector<1x32x32xf32>
    %39 = vector.shape_cast %38 : vector<1x32x32xf32> to vector<32x32xf32>
    %c1_25 = arith.constant 1 : index
    %c32_26 = arith.constant 32 : index
    %c0_27 = arith.constant 0 : index
    %40 = vector.load %arg2[%c1_25, %c32_26, %c0_27] : memref<3x72x32xf32, #tpu.memory_space<vmem>>, vector<1x32x32xf32>
    %41 = vector.shape_cast %40 : vector<1x32x32xf32> to vector<32x32xf32>
    %c1_28 = arith.constant 1 : index
    %c64_29 = arith.constant 64 : index
    %c0_30 = arith.constant 0 : index
    %42 = vector.load %arg2[%c1_28, %c64_29, %c0_30] : memref<3x72x32xf32, #tpu.memory_space<vmem>>, vector<1x1x32xf32>
    %43 = vector.shape_cast %42 : vector<1x1x32xf32> to vector<1x32xf32>
    %c1_31 = arith.constant 1 : index
    %c65_32 = arith.constant 65 : index
    %c0_33 = arith.constant 0 : index
    %44 = vector.load %arg2[%c1_31, %c65_32, %c0_33] : memref<3x72x32xf32, #tpu.memory_space<vmem>>, vector<1x1x32xf32>
    %45 = vector.shape_cast %44 : vector<1x1x32xf32> to vector<1x32xf32>
    %c0_34 = arith.constant 0 : index
    %c1_35 = arith.constant 1 : index
    %c0_36 = arith.constant 0 : index
    %c0_37 = arith.constant 0 : index
    %46 = vector.load %arg3[%c0_34, %c1_35, %c0_36, %c0_37] : memref<1x3x40x32xf32, #tpu.memory_space<vmem>>, vector<1x1x32x32xf32>
    %47 = vector.shape_cast %46 : vector<1x1x32x32xf32> to vector<32x32xf32>
    %c0_38 = arith.constant 0 : index
    %c1_39 = arith.constant 1 : index
    %c32_40 = arith.constant 32 : index
    %c0_41 = arith.constant 0 : index
    %48 = vector.load %arg3[%c0_38, %c1_39, %c32_40, %c0_41] : memref<1x3x40x32xf32, #tpu.memory_space<vmem>>, vector<1x1x1x32xf32>
    %49 = vector.shape_cast %48 : vector<1x1x1x32xf32> to vector<1x32xf32>
    %cst_42 = arith.constant 0.000000e+00 : f32
    %50 = vector.broadcast %cst_42 : f32 to vector<32x32xf32>
    %51 = arith.maximumf %41, %50 : vector<32x32xf32>
    %52 = math.absf %41 : vector<32x32xf32>
    %cst_43 = arith.constant 0.000000e+00 : f32
    %53 = vector.broadcast %cst_43 : f32 to vector<32x32xf32>
    %54 = arith.subf %53, %52 : vector<32x32xf32>
    %55 = math.exp %54 : vector<32x32xf32>
    %56 = math.log1p %55 : vector<32x32xf32>
    %57 = arith.addf %51, %56 : vector<32x32xf32>
    %58 = arith.mulf %47, %57 : vector<32x32xf32>
    %59 = arith.addf %39, %58 : vector<32x32xf32>
    %cst_44 = arith.constant 0.000000e+00 : f32
    %60 = vector.broadcast %cst_44 : f32 to vector<1x32xf32>
    %61 = arith.maximumf %45, %60 : vector<1x32xf32>
    %62 = math.absf %45 : vector<1x32xf32>
    %cst_45 = arith.constant 0.000000e+00 : f32
    %63 = vector.broadcast %cst_45 : f32 to vector<1x32xf32>
    %64 = arith.subf %63, %62 : vector<1x32xf32>
    %65 = math.exp %64 : vector<1x32xf32>
    %66 = math.log1p %65 : vector<1x32xf32>
    %67 = arith.addf %61, %66 : vector<1x32xf32>
    %68 = arith.mulf %49, %67 : vector<1x32xf32>
    %69 = arith.addf %43, %68 : vector<1x32xf32>
    %cst_46 = arith.constant dense<0.000000e+00> : vector<8x32xf32>
    %70 = tpu.matmul %37, %59, %cst_46 {dimension_numbers = #tpu.dot_dimension_numbers<[1], [0], [0], [1], [0, 0, 1, 1], [], []>} : vector<8x32xf32>, vector<32x32xf32>, vector<8x32xf32> -> vector<8x32xf32>
    %71 = vector.broadcast %69 : vector<1x32xf32> to vector<8x32xf32>
    %72 = arith.addf %70, %71 : vector<8x32xf32>
    %cst_47 = arith.constant 0.000000e+00 : f32
    %73 = vector.broadcast %cst_47 : f32 to vector<8x32xf32>
    %74 = arith.maximumf %72, %73 : vector<8x32xf32>
    %c2 = arith.constant 2 : index
    %c0_48 = arith.constant 0 : index
    %c0_49 = arith.constant 0 : index
    %75 = vector.load %arg2[%c2, %c0_48, %c0_49] : memref<3x72x32xf32, #tpu.memory_space<vmem>>, vector<1x32x32xf32>
    %76 = vector.shape_cast %75 : vector<1x32x32xf32> to vector<32x32xf32>
    %c2_50 = arith.constant 2 : index
    %c32_51 = arith.constant 32 : index
    %c0_52 = arith.constant 0 : index
    %77 = vector.load %arg2[%c2_50, %c32_51, %c0_52] : memref<3x72x32xf32, #tpu.memory_space<vmem>>, vector<1x32x32xf32>
    %78 = vector.shape_cast %77 : vector<1x32x32xf32> to vector<32x32xf32>
    %c2_53 = arith.constant 2 : index
    %c64_54 = arith.constant 64 : index
    %c0_55 = arith.constant 0 : index
    %79 = vector.load %arg2[%c2_53, %c64_54, %c0_55] : memref<3x72x32xf32, #tpu.memory_space<vmem>>, vector<1x1x32xf32>
    %80 = vector.shape_cast %79 : vector<1x1x32xf32> to vector<1x32xf32>
    %c2_56 = arith.constant 2 : index
    %c65_57 = arith.constant 65 : index
    %c0_58 = arith.constant 0 : index
    %81 = vector.load %arg2[%c2_56, %c65_57, %c0_58] : memref<3x72x32xf32, #tpu.memory_space<vmem>>, vector<1x1x32xf32>
    %82 = vector.shape_cast %81 : vector<1x1x32xf32> to vector<1x32xf32>
    %c0_59 = arith.constant 0 : index
    %c2_60 = arith.constant 2 : index
    %c0_61 = arith.constant 0 : index
    %c0_62 = arith.constant 0 : index
    %83 = vector.load %arg3[%c0_59, %c2_60, %c0_61, %c0_62] : memref<1x3x40x32xf32, #tpu.memory_space<vmem>>, vector<1x1x32x32xf32>
    %84 = vector.shape_cast %83 : vector<1x1x32x32xf32> to vector<32x32xf32>
    %c0_63 = arith.constant 0 : index
    %c2_64 = arith.constant 2 : index
    %c32_65 = arith.constant 32 : index
    %c0_66 = arith.constant 0 : index
    %85 = vector.load %arg3[%c0_63, %c2_64, %c32_65, %c0_66] : memref<1x3x40x32xf32, #tpu.memory_space<vmem>>, vector<1x1x1x32xf32>
    %86 = vector.shape_cast %85 : vector<1x1x1x32xf32> to vector<1x32xf32>
    %cst_67 = arith.constant 0.000000e+00 : f32
    %87 = vector.broadcast %cst_67 : f32 to vector<32x32xf32>
    %88 = arith.maximumf %78, %87 : vector<32x32xf32>
    %89 = math.absf %78 : vector<32x32xf32>
    %cst_68 = arith.constant 0.000000e+00 : f32
    %90 = vector.broadcast %cst_68 : f32 to vector<32x32xf32>
    %91 = arith.subf %90, %89 : vector<32x32xf32>
    %92 = math.exp %91 : vector<32x32xf32>
    %93 = math.log1p %92 : vector<32x32xf32>
    %94 = arith.addf %88, %93 : vector<32x32xf32>
    %95 = arith.mulf %84, %94 : vector<32x32xf32>
    %96 = arith.addf %76, %95 : vector<32x32xf32>
    %cst_69 = arith.constant 0.000000e+00 : f32
    %97 = vector.broadcast %cst_69 : f32 to vector<1x32xf32>
    %98 = arith.maximumf %82, %97 : vector<1x32xf32>
    %99 = math.absf %82 : vector<1x32xf32>
    %cst_70 = arith.constant 0.000000e+00 : f32
    %100 = vector.broadcast %cst_70 : f32 to vector<1x32xf32>
    %101 = arith.subf %100, %99 : vector<1x32xf32>
    %102 = math.exp %101 : vector<1x32xf32>
    %103 = math.log1p %102 : vector<1x32xf32>
    %104 = arith.addf %98, %103 : vector<1x32xf32>
    %105 = arith.mulf %86, %104 : vector<1x32xf32>
    %106 = arith.addf %80, %105 : vector<1x32xf32>
    %cst_71 = arith.constant dense<0.000000e+00> : vector<8x32xf32>
    %107 = tpu.matmul %74, %96, %cst_71 {dimension_numbers = #tpu.dot_dimension_numbers<[1], [0], [0], [1], [0, 0, 1, 1], [], []>} : vector<8x32xf32>, vector<32x32xf32>, vector<8x32xf32> -> vector<8x32xf32>
    %108 = vector.broadcast %106 : vector<1x32xf32> to vector<8x32xf32>
    %109 = arith.addf %107, %108 : vector<8x32xf32>
    %cst_72 = arith.constant 0.000000e+00 : f32
    %110 = vector.broadcast %cst_72 : f32 to vector<8x32xf32>
    %111 = arith.maximumf %109, %110 : vector<8x32xf32>
    %112 = vector.extract_strided_slice %111 {offsets = [0, 0], sizes = [8, 16], strides = [1, 1]} : vector<8x32xf32> to vector<8x16xf32>
    %cst_73 = arith.constant dense<0xFF800000> : vector<8xf32>
    %113 = vector.multi_reduction <maximumf>, %112, %cst_73 [1] : vector<8x16xf32> to vector<8xf32>
    %114 = vector.shape_cast %113 : vector<8xf32> to vector<8x1xf32>
    %115 = vector.broadcast %114 : vector<8x1xf32> to vector<8x16xf32>
    %116 = arith.subf %112, %115 : vector<8x16xf32>
    %117 = math.exp %116 : vector<8x16xf32>
    %cst_74 = arith.constant dense<0.000000e+00> : vector<8xf32>
    %118 = vector.multi_reduction <add>, %117, %cst_74 [1] : vector<8x16xf32> to vector<8xf32>
    %119 = vector.shape_cast %118 : vector<8xf32> to vector<8x1xf32>
    %120 = math.log %119 : vector<8x1xf32>
    %121 = vector.broadcast %120 : vector<8x1xf32> to vector<8x16xf32>
    %122 = arith.subf %116, %121 : vector<8x16xf32>
    %c0_75 = arith.constant 0 : index
    %c0_76 = arith.constant 0 : index
    %c0_77 = arith.constant 0 : index
    %123 = vector.load %arg4[%c0_75, %c0_76, %c0_77] : memref<1x8x16xf32, #tpu.memory_space<vmem>>, vector<1x8x16xf32>
    %124 = vector.shape_cast %123 : vector<1x8x16xf32> to vector<8x16xf32>
    %125 = vector.shape_cast %122 : vector<8x16xf32> to vector<1x8x16xf32>
    tpu.vector_store %arg4[%c0_75, %c0_76, %c0_77], %125 {strides = array<i32>} : memref<1x8x16xf32, #tpu.memory_space<vmem>>, vector<1x8x16xf32>,
    return
  }
  func.func @transform_0(%arg0: i32) -> (i32, i32) {
    %c0_i32 = arith.constant 0 : i32
    %c0_i32_0 = arith.constant 0 : i32
    %c0_i32_1 = arith.constant 0 : i32
    return %c0_i32, %c0_i32_0 : i32, i32
  }
  func.func @transform_1(%arg0: i32) -> (i32, i32, i32) {
    %c0_i32 = arith.constant 0 : i32
    %c0_i32_0 = arith.constant 0 : i32
    %c0_i32_1 = arith.constant 0 : i32
    %c0_i32_2 = arith.constant 0 : i32
    return %c0_i32, %c0_i32_0, %c0_i32_1 : i32, i32, i32
  }
  func.func @transform_2(%arg0: i32) -> (i32, i32, i32, i32) {
    %c0_i32 = arith.constant 0 : i32
    %c0_i32_0 = arith.constant 0 : i32
    %c0_i32_1 = arith.constant 0 : i32
    %c0_i32_2 = arith.constant 0 : i32
    return %arg0, %c0_i32, %c0_i32_0, %c0_i32_1 : i32, i32, i32, i32
  }
  func.func @transform_3(%arg0: i32) -> (i32, i32, i32) {
    %c0_i32 = arith.constant 0 : i32
    %c0_i32_0 = arith.constant 0 : i32
    %c0_i32_1 = arith.constant 0 : i32
    return %arg0, %c0_i32, %c0_i32_0 : i32, i32, i32
  }
}

</mosaic_0001>

<llo_original>
// kernel: tpu_custom_call.1
$region0: #{tpu_custom_call.1}
  #allocation0 [shape = 'u32[]', space=smem, size = 0x4, offset = 0x4, fixed_abs, tag = 'smem constant byte address 0x4 - core index']
  #allocation1 [shape = 'u32[144,128]{1,0:T(1,128)}', space=vmem, size = 0x12000, scoped, tag = 'internal scratch']
  %s0 = inlined_call_operand.vmem [shape: f32[8,32], index: 0, kind: input, shape index: {}]
  %s1 = inlined_call_operand.vmem [shape: f32[3,72,32], index: 1, kind: input, shape index: {}]
  %s2 = inlined_call_operand.vmem [shape: f32[4,3,40,32], index: 2, kind: input, shape index: {}]
  %s3 = inlined_call_operand.hbm [shape: f32[4,8,16], index: 3, kind: output, shape index: {}]
  %s4 = sld [smem:[#allocation0]]
  $region45: #{tpu_custom_call.1} parent=0
    _
  %s6 = ssub.s32 1, %s4
  %s7 = scalar_select 0, %s6, %s4
  $region1: #{tpu_custom_call.1} parent=0
    #allocation2 [shape = 'u8[8192]{0}', space=vmem, size = 0x2000, scoped, tag = 'output window, operand 0']
    #allocation3 [shape = 's32[2]{0}', space=sflag, size = 0x8, scoped, tag = 'scoped memory for tpu_custom_call.1']
    %8 = vsyncpa [#allocation3], 0
    %s9 = scalar_lea.sflag [#allocation3], 1
    %10 = vsyncpa %s9, 0
    loop: start=0, step=1, limit=6
    $region2: #{tpu_custom_call.1} parent=1 // loop_pre_header
      _
    $region3: #{tpu_custom_call.1} parent=1 // loop_header
      %s12 = sphi 0, %s16
      %p13 = scmp.ge.s32.totalorder %s12, 6
      %s20 = sphi 0, %s20
      %s22 = sphi 0, %s20
      %s23 = sphi 0, %s22
      %s37 = sphi 0, %s23
      %s41 = sphi 0, %s41
      %s43 = sphi 0, %s41
      %s44 = sphi 0, %s43
      %s58 = sphi 0, %s44
      %s64 = sphi 0, %s66
      %s67 = sphi 0, %s64
      %s68 = sphi 0, %s67
      %s84 = sphi 0, %s68
      %s90 = sphi 0, %s92
      %s93 = sphi 0, %s90
      %s94 = sphi 0, %s93
      %s110 = sphi 0, %s94
    $region4: #{tpu_custom_call.1} parent=1 // loop_header_branch
      %15 = sbr.rel (%p13) target = $region8
    $region5: #{tpu_custom_call.1} parent=1 // loop_body
      %s17 = ssub.s32 %s12, 1
      %s18 = ssub.s32 %s12, 2
      %s19 = sadd.s32 %s12, 1
      %s21 = sadd.s32 %s20, 1
      %p24 = scmp.eq.s32.totalorder %s12, 3
      %p25 = scmp.ne.s32.totalorder %s20, %s22
      %p26 = scmp.eq.s32.totalorder %s12, 0
      %p27 = por %p25, %p26
      %p28 = scmp.ne.s32.totalorder %s20, %s22
      %p29 = scmp.eq.s32.totalorder %s17, 3
      %p30 = por %p28, %p29
      %p31 = scmp.ne.s32.totalorder %s22, %s23
      %p32 = scmp.eq.s32.totalorder %s17, 0
      %p33 = por %p31, %p32
      %p34 = scmp.ne.s32.totalorder %s22, %s23
      %p35 = scmp.eq.s32.totalorder %s18, 3
      %p36 = por %p34, %p35
      %p38 = scmp.ne.s32.totalorder %s23, %s37
      %p39 = scmp.eq.s32.totalorder %s18, 0
      %p40 = por %p38, %p39
      %s42 = sadd.s32 %s41, 1
      %p45 = scmp.eq.s32.totalorder %s12, 3
      %p46 = scmp.ne.s32.totalorder %s41, %s43
      %p47 = scmp.eq.s32.totalorder %s12, 0
      %p48 = por %p46, %p47
      %p49 = scmp.ne.s32.totalorder %s41, %s43
      %p50 = scmp.eq.s32.totalorder %s17, 3
      %p51 = por %p49, %p50
      %p52 = scmp.ne.s32.totalorder %s43, %s44
      %p53 = scmp.eq.s32.totalorder %s17, 0
      %p54 = por %p52, %p53
      %p55 = scmp.ne.s32.totalorder %s43, %s44
      %p56 = scmp.eq.s32.totalorder %s18, 3
      %p57 = por %p55, %p56
      %p59 = scmp.ne.s32.totalorder %s44, %s58
      %p60 = scmp.eq.s32.totalorder %s18, 0
      %p61 = por %p59, %p60
      %s62 = ssub.s32 %s12, %s19
      %p63 = scmp.eq.s32.totalorder %s62, 0
      %s65 = sadd.s32 %s64, 1
      %s66 = scalar_select %p63, %s64, %s65
      %p69 = pneg %p63
      %p70 = scmp.eq.s32.totalorder %s12, 3
      %p71 = por %p69, %p70
      %p72 = scmp.ne.s32.totalorder %s64, %s67
      %p73 = scmp.eq.s32.totalorder %s12, 0
      %p74 = por %p72, %p73
      %p75 = scmp.ne.s32.totalorder %s64, %s67
      %p76 = scmp.eq.s32.totalorder %s17, 3
      %p77 = por %p75, %p76
      %p78 = scmp.ne.s32.totalorder %s67, %s68
      %p79 = scmp.eq.s32.totalorder %s17, 0
      %p80 = por %p78, %p79
      %p81 = scmp.ne.s32.totalorder %s67, %s68
      %p82 = scmp.eq.s32.totalorder %s18, 3
      %p83 = por %p81, %p82
      %p85 = scmp.ne.s32.totalorder %s68, %s84
      %p86 = scmp.eq.s32.totalorder %s18, 0
      %p87 = por %p85, %p86
      %s88 = ssub.s32 %s12, %s19
      %p89 = scmp.eq.s32.totalorder %s88, 0
      %s91 = sadd.s32 %s90, 1
      %s92 = scalar_select %p89, %s90, %s91
      %p95 = pneg %p89
      %p96 = scmp.eq.s32.totalorder %s12, 3
      %p97 = por %p95, %p96
      %p98 = scmp.ne.s32.totalorder %s90, %s93
      %p99 = scmp.eq.s32.totalorder %s12, 0
      %p100 = por %p98, %p99
      %p101 = scmp.ne.s32.totalorder %s90, %s93
      %p102 = scmp.eq.s32.totalorder %s17, 3
      %p103 = por %p101, %p102
      %p104 = scmp.ne.s32.totalorder %s93, %s94
      %p105 = scmp.eq.s32.totalorder %s17, 0
      %p106 = por %p104, %p105
      %p107 = scmp.ne.s32.totalorder %s93, %s94
      %p108 = scmp.eq.s32.totalorder %s18, 3
      %p109 = por %p107, %p108
      %p111 = scmp.ne.s32.totalorder %s94, %s110
      %p112 = scmp.eq.s32.totalorder %s18, 0
      %p113 = por %p111, %p112
      %p114 = scmp.le.s32.totalorder 1, %s12
      %p115 = scmp.lt.s32.totalorder %s12, 5
      %p116 = pnand %p114, %p115
      %p117 = pneg %p116
      // Predicated region
      $region9: #{tpu_custom_call.1} parent=5 // pred_check
        _
      $region10: #{tpu_custom_call.1} parent=5 // pred_check_branch
        %119 = sbr.rel (%p116) target = $region12
      $region11: #{tpu_custom_call.1} parent=5 // pred_region
        %s120 = ssub.s32 %s12, 1
        // Predicated region
        $region13: #{tpu_custom_call.1} parent=11 // pred_check
          %p121 = pneg %p33
        $region14: #{tpu_custom_call.1} parent=11 // pred_check_branch
          %123 = sbr.rel (%p121) target = $region16
        $region15: #{tpu_custom_call.1} parent=11 // pred_region
          _
        $region16: #{tpu_custom_call.1} parent=11 // pred_fallthru
          _
        // Predicated region
        $region17: #{tpu_custom_call.1} parent=11 // pred_check
          %p124 = pneg %p54
        $region18: #{tpu_custom_call.1} parent=11 // pred_check_branch
          %126 = sbr.rel (%p124) target = $region20
        $region19: #{tpu_custom_call.1} parent=11 // pred_region
          _
        $region20: #{tpu_custom_call.1} parent=11 // pred_fallthru
          _
      $region12: #{tpu_custom_call.1} parent=5 // pred_fallthru
        _
      %p127 = scmp.lt.s32.totalorder %s12, 4
      // Predicated region
      $region21: #{tpu_custom_call.1} parent=5 // pred_check
        %p128 = pneg %p127
      $region22: #{tpu_custom_call.1} parent=5 // pred_check_branch
        %130 = sbr.rel (%p128) target = $region24
      $region23: #{tpu_custom_call.1} parent=5 // pred_region
        // Predicated region
        $region25: #{tpu_custom_call.1} parent=23 // pred_check
          %p131 = pneg %p74
        $region26: #{tpu_custom_call.1} parent=23 // pred_check_branch
          %133 = sbr.rel (%p131) target = $region28
        $region27: #{tpu_custom_call.1} parent=23 // pred_region
          %p134 = scmp.lt.s32.totalorder %s12, 3
          %s135 = scalar_select %p134, %s12, 3
          %s136 = smul.addr %s135, 15
          %s137 = smul.addr %s136, 8
          %s138 = scalar_lea.vmem %s2, %s137
        $region28: #{tpu_custom_call.1} parent=23 // pred_fallthru
          _
      $region24: #{tpu_custom_call.1} parent=5 // pred_fallthru
        _
      %p139 = scmp.le.s32.totalorder 1, %s12
      %p140 = scmp.lt.s32.totalorder %s12, 5
      %p141 = pnand %p139, %p140
      %p142 = pneg %p141
      // Predicated region
      $region29: #{tpu_custom_call.1} parent=5 // pred_check
        _
      $region30: #{tpu_custom_call.1} parent=5 // pred_check_branch
        %144 = sbr.rel (%p141) target = $region32
      $region31: #{tpu_custom_call.1} parent=5 // pred_region
        %s145 = ssub.s32 %s12, 1
        %p146 = pneg %p33
        %p147 = pneg %p30
        %p148 = pneg %p54
        %p149 = pneg %p51
        %p150 = scmp.lt.s32.totalorder %s17, 3
        %s151 = scalar_select %p150, %s17, 3
        %s152 = smul.addr %s151, 15
        %s153 = smul.addr %s152, 8
        %s154 = scalar_lea.vmem %s2, %s153
        %p155 = pneg %p80
        %p156 = pneg %p77
        %p157 = pneg %p106
        %p158 = pneg %p103
        %s159 = sand.u32 %s93, 1
        %s160 = scalar_lea.sflag [#allocation3], %s159
        %s161 = sand.u32 %s93, 1
        %s162 = smul.addr %s161, 8
        %s163 = scalar_lea.vmem [#allocation2], %s162
        %p164 = scmp.lt.s32.totalorder %s17, 3
        %s165 = scalar_select %p164, %s17, 3
        %s166 = smul.addr %s165, 15
        %s167 = smul.addr %s166, 8
        %s168 = scalar_lea.vmem %s2, %s167
        %v169 = vld [vmem:[%s0] sm:$0xff]
        %v170 = vld [vmem:[%s1] sm:$0xff]
        %v171 = vld [vmem:[%s1 + $0x8] sm:$0xff]
        %v172 = vld [vmem:[%s1 + $0x10] sm:$0xff]
        %v173 = vld [vmem:[%s1 + $0x18] sm:$0xff]
        %v174 = vld [vmem:[%s1 + $0x20] sm:$0xff]
        %v175 = vld [vmem:[%s1 + $0x28] sm:$0xff]
        %v176 = vld [vmem:[%s1 + $0x30] sm:$0xff]
        %v177 = vld [vmem:[%s1 + $0x38] sm:$0xff]
        %v178 = vld [vmem:[%s1 + $0x40] sm:$0x1]
        %v179 = vld [vmem:[%s1 + $0x41] sm:$0x1]
        %v180 = vld [vmem:[%s168] sm:$0xff]
        %v181 = vld [vmem:[%s168 + $0x8] sm:$0xff]
        %v182 = vld [vmem:[%s168 + $0x10] sm:$0xff]
        %v183 = vld [vmem:[%s168 + $0x18] sm:$0xff]
        %v184 = vld [vmem:[%s168 + $0x20] sm:$0x1]
        %v185 = vmax.f32 %v174, 0.0
        %v186 = vmax.f32 %v175, 0.0
        %v187 = vmax.f32 %v176, 0.0
        %v188 = vmax.f32 %v177, 0.0
        %v189 = vand.u32 2147483647, %v174
        %v190 = vand.u32 2147483647, %v175
        %v191 = vand.u32 2147483647, %v176
        %v192 = vand.u32 2147483647, %v177
        %v193 = vsub.f32 0.0, %v189
        %v194 = vsub.f32 0.0, %v190
        %v195 = vsub.f32 0.0, %v191
        %v196 = vsub.f32 0.0, %v192
        %v197 = vmul.f32 %v193, 1.442695
        %v198 = vpow.pop %v197
        %v199 = vmul.f32 %v194, 1.442695
        %v200 = vpow.pop %v199
        %v201 = vmul.f32 %v195, 1.442695
        %v202 = vpow.pop %v201
        %v203 = vmul.f32 %v196, 1.442695
        %v204 = vpow.pop %v203
        %v205 = vadd.f32 %v198, 1.0
        %v206 = vlog2.pop %v205
        %v207 = vmul.f32 %v206, 0.6931472
        %v208 = vmul.f32 -0.5, %v198
        %v209 = vadd.f32 %v208, 1.0
        %v210 = vmul.f32 %v209, %v198
        %v211 = vand.u32 2147483647, %v198
        %vm212 = vcmp.lt.f32.partialorder %v211, 0.0004427343
        %v213 = vsel %vm212, %v210, %v207
        %v214 = vadd.f32 %v200, 1.0
        %v215 = vlog2.pop %v214
        %v216 = vmul.f32 %v215, 0.6931472
        %v217 = vmul.f32 -0.5, %v200
        %v218 = vadd.f32 %v217, 1.0
        %v219 = vmul.f32 %v218, %v200
        %v220 = vand.u32 2147483647, %v200
        %vm221 = vcmp.lt.f32.partialorder %v220, 0.0004427343
        %v222 = vsel %vm221, %v219, %v216
        %v223 = vadd.f32 %v202, 1.0
        %v224 = vlog2.pop %v223
        %v225 = vmul.f32 %v224, 0.6931472
        %v226 = vmul.f32 -0.5, %v202
        %v227 = vadd.f32 %v226, 1.0
        %v228 = vmul.f32 %v227, %v202
        %v229 = vand.u32 2147483647, %v202
        %vm230 = vcmp.lt.f32.partialorder %v229, 0.0004427343
        %v231 = vsel %vm230, %v228, %v225
        %v232 = vadd.f32 %v204, 1.0
        %v233 = vlog2.pop %v232
        %v234 = vmul.f32 %v233, 0.6931472
        %v235 = vmul.f32 -0.5, %v204
        %v236 = vadd.f32 %v235, 1.0
        %v237 = vmul.f32 %v236, %v204
        %v238 = vand.u32 2147483647, %v204
        %vm239 = vcmp.lt.f32.partialorder %v238, 0.0004427343
        %v240 = vsel %vm239, %v237, %v234
        %v241 = vadd.f32 %v185, %v213
        %v242 = vadd.f32 %v186, %v222
        %v243 = vadd.f32 %v187, %v231
        %v244 = vadd.f32 %v188, %v240
        %v245 = vmul.f32 %v180, %v241
        %v246 = vmul.f32 %v181, %v242
        %v247 = vmul.f32 %v182, %v243
        %v248 = vmul.f32 %v183, %v244
        %v249 = vadd.f32 %v170, %v245
        %v250 = vadd.f32 %v171, %v246
        %v251 = vadd.f32 %v172, %v247
        %v252 = vadd.f32 %v173, %v248
        %v253 = vmax.f32 %v179, 0.0
        %v254 = vand.u32 2147483647, %v179
        %v255 = vsub.f32 0.0, %v254
        %v256 = vmul.f32 %v255, 1.442695
        %v257 = vpow.pop %v256
        %v258 = vadd.f32 %v257, 1.0
        %v259 = vlog2.pop %v258
        %v260 = vmul.f32 %v259, 0.6931472
        %v261 = vmul.f32 -0.5, %v257
        %v262 = vadd.f32 %v261, 1.0
        %v263 = vmul.f32 %v262, %v257
        %v264 = vand.u32 2147483647, %v257
        %vm265 = vcmp.lt.f32.partialorder %v264, 0.0004427343
        %v266 = vsel %vm265, %v263, %v260
        %v267 = vadd.f32 %v253, %v266
        %v268 = vmul.f32 %v184, %v267
        %v269 = vadd.f32 %v178, %v268
        %v270 = vlaneseq
        %v271 = vshrl.u32 %v270, 7
        %v272 = vsub.s32 0, %v271
        %v273 = vrot.slane %v269, %v272
        %vm274 = vcmask 261120
        %v276 = vsel %vm274, %v169, 0
        %278 = vmatprep.subr.mxu0 0.0
        %279 = vmatpush1.msra.mxu0 %v249
        %280 = vmatprep.subr.mxu0 0.0
        %281 = vmatpush1.msra.mxu0 %v250
        %282 = vmatprep.subr.mxu0 0.0
        %283 = vmatpush1.msra.mxu0 %v251
        %284 = vmatprep.subr.mxu0 0.0
        %285 = vmatpush1.msra.mxu0 %v252
        %286 = vmatprep.subr.mxu0 0.0
        %287 = vmatpush1.msra.mxu0 0.0
        %288 = vmatprep.subr.mxu0 0.0
        %289 = vmatpush1.msra.mxu0 0.0
        %290 = vmatprep.subr.mxu0 0.0
        %291 = vmatpush1.msra.mxu0 0.0
        %292 = vmatprep.subr.mxu0 0.0
        %293 = vmatpush1.msra.mxu0 0.0
        %294 = vmatprep.subr.mxu0 0.0
        %295 = vmatpush1.msra.mxu0 0.0
        %296 = vmatprep.subr.mxu0 0.0
        %297 = vmatpush1.msra.mxu0 0.0
        %298 = vmatprep.subr.mxu0 0.0
        %299 = vmatpush1.msra.mxu0 0.0
        %300 = vmatprep.subr.mxu0 0.0
        %301 = vmatpush1.msra.mxu0 0.0
        %302 = vmatprep.subr.mxu0 0.0
        %303 = vmatpush1.msra.mxu0 0.0
        %304 = vmatprep.subr.mxu0 0.0
        %305 = vmatpush1.msra.mxu0 0.0
        %306 = vmatprep.subr.mxu0 0.0
        %307 = vmatpush1.msra.mxu0 0.0
        %308 = vmatprep.subr.mxu0 0.0
        %309 = vmatpush1.msra.mxu0 0.0
        %310 = vmatprep.subr.mxu0 0.0
        %311 = vmatpush1.msra.mxu0 0.0
        %312 = vmatprep.subr.mxu0 0.0
        %313 = vmatpush1.msra.mxu0 0.0
        %314 = vmatprep.subr.mxu0 0.0
        %315 = vmatpush1.msra.mxu0 0.0
        %316 = vmatprep.subr.mxu0 0.0
        %317 = vmatpush1.msra.mxu0 0.0
        %318 = vmatprep.subr.mxu0 0.0
        %319 = vmatpush1.msra.mxu0 0.0
        %320 = vmatprep.subr.mxu0 0.0
        %321 = vmatpush1.msra.mxu0 0.0
        %322 = vmatprep.subr.mxu0 0.0
        %323 = vmatpush1.msra.mxu0 0.0
        %324 = vmatprep.subr.mxu0 0.0
        %325 = vmatpush1.msra.mxu0 0.0
        %326 = vmatprep.subr.mxu0 0.0
        %327 = vmatpush1.msra.mxu0 0.0
        %328 = vmatprep.subr.mxu0 0.0
        %329 = vmatpush1.msra.mxu0 0.0
        %330 = vmatprep.subr.mxu0 0.0
        %331 = vmatpush1.msra.mxu0 0.0
        %332 = vmatprep.subr.mxu0 0.0
        %333 = vmatpush1.msra.mxu0 0.0
        %334 = vmatprep.subr.mxu0 0.0
        %335 = vmatpush1.msra.mxu0 0.0
        %336 = vmatprep.subr.mxu0 0.0
        %337 = vmatpush1.msra.mxu0 0.0
        %338 = vmatprep.subr.mxu0 0.0
        %339 = vmatpush1.msra.mxu0 0.0
        %340 = vmatprep.subr.mxu0 0.0
        %341 = vmatpush1.msra.mxu0 0.0
        %342 = vmatprep.mubr.f32.mxu0 0.0
        %343 = vmatmul.mubr.f32.gmra.mrb[0].mxu0 %v276
        %v344 = vpop.f32.mrb[0].mxu0
        %v345 = vadd.f32 %v273, %v344
        %v346 = vpop.f32.mrb[0].mxu0
        %347 = vdwg.mxu0
        %v348 = vmax.f32 %v345, 0.0
        %s349 = scalar_lea.vmem %s1, 72
        %v350 = vld [vmem:[%s349] sm:$0xff]
        %v351 = vld [vmem:[%s349 + $0x8] sm:$0xff]
        %v352 = vld [vmem:[%s349 + $0x10] sm:$0xff]
        %v353 = vld [vmem:[%s349 + $0x18] sm:$0xff]
        %v354 = vld [vmem:[%s349 + $0x20] sm:$0xff]
        %v355 = vld [vmem:[%s349 + $0x28] sm:$0xff]
        %v356 = vld [vmem:[%s349 + $0x30] sm:$0xff]
        %v357 = vld [vmem:[%s349 + $0x38] sm:$0xff]
        %v358 = vld [vmem:[%s349 + $0x40] sm:$0x1]
        %v359 = vld [vmem:[%s349 + $0x41] sm:$0x1]
        %s360 = scalar_lea.vmem %s168, 40
        %v361 = vld [vmem:[%s360] sm:$0xff]
        %v362 = vld [vmem:[%s360 + $0x8] sm:$0xff]
        %v363 = vld [vmem:[%s360 + $0x10] sm:$0xff]
        %v364 = vld [vmem:[%s360 + $0x18] sm:$0xff]
        %v365 = vld [vmem:[%s360 + $0x20] sm:$0x1]
        %v366 = vmax.f32 %v354, 0.0
        %v367 = vmax.f32 %v355, 0.0
        %v368 = vmax.f32 %v356, 0.0
        %v369 = vmax.f32 %v357, 0.0
        %v370 = vand.u32 2147483647, %v354
        %v371 = vand.u32 2147483647, %v355
        %v372 = vand.u32 2147483647, %v356
        %v373 = vand.u32 2147483647, %v357
        %v374 = vsub.f32 0.0, %v370
        %v375 = vsub.f32 0.0, %v371
        %v376 = vsub.f32 0.0, %v372
        %v377 = vsub.f32 0.0, %v373
        %v378 = vmul.f32 %v374, 1.442695
        %v379 = vpow.pop %v378
        %v380 = vmul.f32 %v375, 1.442695
        %v381 = vpow.pop %v380
        %v382 = vmul.f32 %v376, 1.442695
        %v383 = vpow.pop %v382
        %v384 = vmul.f32 %v377, 1.442695
        %v385 = vpow.pop %v384
        %v386 = vadd.f32 %v379, 1.0
        %v387 = vlog2.pop %v386
        %v388 = vmul.f32 %v387, 0.6931472
        %v389 = vmul.f32 -0.5, %v379
        %v390 = vadd.f32 %v389, 1.0
        %v391 = vmul.f32 %v390, %v379
        %v392 = vand.u32 2147483647, %v379
        %vm393 = vcmp.lt.f32.partialorder %v392, 0.0004427343
        %v394 = vsel %vm393, %v391, %v388
        %v395 = vadd.f32 %v381, 1.0
        %v396 = vlog2.pop %v395
        %v397 = vmul.f32 %v396, 0.6931472
        %v398 = vmul.f32 -0.5, %v381
        %v399 = vadd.f32 %v398, 1.0
        %v400 = vmul.f32 %v399, %v381
        %v401 = vand.u32 2147483647, %v381
        %vm402 = vcmp.lt.f32.partialorder %v401, 0.0004427343
        %v403 = vsel %vm402, %v400, %v397
        %v404 = vadd.f32 %v383, 1.0
        %v405 = vlog2.pop %v404
        %v406 = vmul.f32 %v405, 0.6931472
        %v407 = vmul.f32 -0.5, %v383
        %v408 = vadd.f32 %v407, 1.0
        %v409 = vmul.f32 %v408, %v383
        %v410 = vand.u32 2147483647, %v383
        %vm411 = vcmp.lt.f32.partialorder %v410, 0.0004427343
        %v412 = vsel %vm411, %v409, %v406
        %v413 = vadd.f32 %v385, 1.0
        %v414 = vlog2.pop %v413
        %v415 = vmul.f32 %v414, 0.6931472
        %v416 = vmul.f32 -0.5, %v385
        %v417 = vadd.f32 %v416, 1.0
        %v418 = vmul.f32 %v417, %v385
        %v419 = vand.u32 2147483647, %v385
        %vm420 = vcmp.lt.f32.partialorder %v419, 0.0004427343
        %v421 = vsel %vm420, %v418, %v415
        %v422 = vadd.f32 %v366, %v394
        %v423 = vadd.f32 %v367, %v403
        %v424 = vadd.f32 %v368, %v412
        %v425 = vadd.f32 %v369, %v421
        %v426 = vmul.f32 %v361, %v422
        %v427 = vmul.f32 %v362, %v423
        %v428 = vmul.f32 %v363, %v424
        %v429 = vmul.f32 %v364, %v425
        %v430 = vadd.f32 %v350, %v426
        %v431 = vadd.f32 %v351, %v427
        %v432 = vadd.f32 %v352, %v428
        %v433 = vadd.f32 %v353, %v429
        %v434 = vmax.f32 %v359, 0.0
        %v435 = vand.u32 2147483647, %v359
        %v436 = vsub.f32 0.0, %v435
        %v437 = vmul.f32 %v436, 1.442695
        %v438 = vpow.pop %v437
        %v439 = vadd.f32 %v438, 1.0
        %v440 = vlog2.pop %v439
        %v441 = vmul.f32 %v440, 0.6931472
        %v442 = vmul.f32 -0.5, %v438
        %v443 = vadd.f32 %v442, 1.0
        %v444 = vmul.f32 %v443, %v438
        %v445 = vand.u32 2147483647, %v438
        %vm446 = vcmp.lt.f32.partialorder %v445, 0.0004427343
        %v447 = vsel %vm446, %v444, %v441
        %v448 = vadd.f32 %v434, %v447
        %v449 = vmul.f32 %v365, %v448
        %v450 = vadd.f32 %v358, %v449
        %v451 = vlaneseq
        %v452 = vshrl.u32 %v451, 7
        %v453 = vsub.s32 0, %v452
        %v454 = vrot.slane %v450, %v453
        %v456 = vsel %vm274, %v348, 0
        %458 = vmatprep.subr.mxu0 0.0
        %459 = vmatpush1.msra.mxu0 %v430
        %460 = vmatprep.subr.mxu0 0.0
        %461 = vmatpush1.msra.mxu0 %v431
        %462 = vmatprep.subr.mxu0 0.0
        %463 = vmatpush1.msra.mxu0 %v432
        %464 = vmatprep.subr.mxu0 0.0
        %465 = vmatpush1.msra.mxu0 %v433
        %466 = vmatprep.subr.mxu0 0.0
        %467 = vmatpush1.msra.mxu0 0.0
        %468 = vmatprep.subr.mxu0 0.0
        %469 = vmatpush1.msra.mxu0 0.0
        %470 = vmatprep.subr.mxu0 0.0
        %471 = vmatpush1.msra.mxu0 0.0
        %472 = vmatprep.subr.mxu0 0.0
        %473 = vmatpush1.msra.mxu0 0.0
        %474 = vmatprep.subr.mxu0 0.0
        %475 = vmatpush1.msra.mxu0 0.0
        %476 = vmatprep.subr.mxu0 0.0
        %477 = vmatpush1.msra.mxu0 0.0
        %478 = vmatprep.subr.mxu0 0.0
        %479 = vmatpush1.msra.mxu0 0.0
        %480 = vmatprep.subr.mxu0 0.0
        %481 = vmatpush1.msra.mxu0 0.0
        %482 = vmatprep.subr.mxu0 0.0
        %483 = vmatpush1.msra.mxu0 0.0
        %484 = vmatprep.subr.mxu0 0.0
        %485 = vmatpush1.msra.mxu0 0.0
        %486 = vmatprep.subr.mxu0 0.0
        %487 = vmatpush1.msra.mxu0 0.0
        %488 = vmatprep.subr.mxu0 0.0
        %489 = vmatpush1.msra.mxu0 0.0
        %490 = vmatprep.subr.mxu0 0.0
        %491 = vmatpush1.msra.mxu0 0.0
        %492 = vmatprep.subr.mxu0 0.0
        %493 = vmatpush1.msra.mxu0 0.0
        %494 = vmatprep.subr.mxu0 0.0
        %495 = vmatpush1.msra.mxu0 0.0
        %496 = vmatprep.subr.mxu0 0.0
        %497 = vmatpush1.msra.mxu0 0.0
        %498 = vmatprep.subr.mxu0 0.0
        %499 = vmatpush1.msra.mxu0 0.0
        %500 = vmatprep.subr.mxu0 0.0
        %501 = vmatpush1.msra.mxu0 0.0
        %502 = vmatprep.subr.mxu0 0.0
        %503 = vmatpush1.msra.mxu0 0.0
        %504 = vmatprep.subr.mxu0 0.0
        %505 = vmatpush1.msra.mxu0 0.0
        %506 = vmatprep.subr.mxu0 0.0
        %507 = vmatpush1.msra.mxu0 0.0
        %508 = vmatprep.subr.mxu0 0.0
        %509 = vmatpush1.msra.mxu0 0.0
        %510 = vmatprep.subr.mxu0 0.0
        %511 = vmatpush1.msra.mxu0 0.0
        %512 = vmatprep.subr.mxu0 0.0
        %513 = vmatpush1.msra.mxu0 0.0
        %514 = vmatprep.subr.mxu0 0.0
        %515 = vmatpush1.msra.mxu0 0.0
        %516 = vmatprep.subr.mxu0 0.0
        %517 = vmatpush1.msra.mxu0 0.0
        %518 = vmatprep.subr.mxu0 0.0
        %519 = vmatpush1.msra.mxu0 0.0
        %520 = vmatprep.subr.mxu0 0.0
        %521 = vmatpush1.msra.mxu0 0.0
        %522 = vmatprep.mubr.f32.mxu0 0.0
        %523 = vmatmul.mubr.f32.gmra.mrb[0].mxu0 %v456
        %v524 = vpop.f32.mrb[0].mxu0
        %v525 = vadd.f32 %v454, %v524
        %v526 = vpop.f32.mrb[0].mxu0
        %527 = vdwg.mxu0
        %v528 = vmax.f32 %v525, 0.0
        %s529 = scalar_lea.vmem %s1, 144
        %v530 = vld [vmem:[%s529] sm:$0xff]
        %v531 = vld [vmem:[%s529 + $0x8] sm:$0xff]
        %v532 = vld [vmem:[%s529 + $0x10] sm:$0xff]
        %v533 = vld [vmem:[%s529 + $0x18] sm:$0xff]
        %v534 = vld [vmem:[%s529 + $0x20] sm:$0xff]
        %v535 = vld [vmem:[%s529 + $0x28] sm:$0xff]
        %v536 = vld [vmem:[%s529 + $0x30] sm:$0xff]
        %v537 = vld [vmem:[%s529 + $0x38] sm:$0xff]
        %v538 = vld [vmem:[%s529 + $0x40] sm:$0x1]
        %v539 = vld [vmem:[%s529 + $0x41] sm:$0x1]
        %s540 = scalar_lea.vmem %s168, 80
        %v541 = vld [vmem:[%s540] sm:$0xff]
        %v542 = vld [vmem:[%s540 + $0x8] sm:$0xff]
        %v543 = vld [vmem:[%s540 + $0x10] sm:$0xff]
        %v544 = vld [vmem:[%s540 + $0x18] sm:$0xff]
        %v545 = vld [vmem:[%s540 + $0x20] sm:$0x1]
        %v546 = vmax.f32 %v534, 0.0
        %v547 = vmax.f32 %v535, 0.0
        %v548 = vmax.f32 %v536, 0.0
        %v549 = vmax.f32 %v537, 0.0
        %v550 = vand.u32 2147483647, %v534
        %v551 = vand.u32 2147483647, %v535
        %v552 = vand.u32 2147483647, %v536
        %v553 = vand.u32 2147483647, %v537
        %v554 = vsub.f32 0.0, %v550
        %v555 = vsub.f32 0.0, %v551
        %v556 = vsub.f32 0.0, %v552
        %v557 = vsub.f32 0.0, %v553
        %v558 = vmul.f32 %v554, 1.442695
        %v559 = vpow.pop %v558
        %v560 = vmul.f32 %v555, 1.442695
        %v561 = vpow.pop %v560
        %v562 = vmul.f32 %v556, 1.442695
        %v563 = vpow.pop %v562
        %v564 = vmul.f32 %v557, 1.442695
        %v565 = vpow.pop %v564
        %v566 = vadd.f32 %v559, 1.0
        %v567 = vlog2.pop %v566
        %v568 = vmul.f32 %v567, 0.6931472
        %v569 = vmul.f32 -0.5, %v559
        %v570 = vadd.f32 %v569, 1.0
        %v571 = vmul.f32 %v570, %v559
        %v572 = vand.u32 2147483647, %v559
        %vm573 = vcmp.lt.f32.partialorder %v572, 0.0004427343
        %v574 = vsel %vm573, %v571, %v568
        %v575 = vadd.f32 %v561, 1.0
        %v576 = vlog2.pop %v575
        %v577 = vmul.f32 %v576, 0.6931472
        %v578 = vmul.f32 -0.5, %v561
        %v579 = vadd.f32 %v578, 1.0
        %v580 = vmul.f32 %v579, %v561
        %v581 = vand.u32 2147483647, %v561
        %vm582 = vcmp.lt.f32.partialorder %v581, 0.0004427343
        %v583 = vsel %vm582, %v580, %v577
        %v584 = vadd.f32 %v563, 1.0
        %v585 = vlog2.pop %v584
        %v586 = vmul.f32 %v585, 0.6931472
        %v587 = vmul.f32 -0.5, %v563
        %v588 = vadd.f32 %v587, 1.0
        %v589 = vmul.f32 %v588, %v563
        %v590 = vand.u32 2147483647, %v563
        %vm591 = vcmp.lt.f32.partialorder %v590, 0.0004427343
        %v592 = vsel %vm591, %v589, %v586
        %v593 = vadd.f32 %v565, 1.0
        %v594 = vlog2.pop %v593
        %v595 = vmul.f32 %v594, 0.6931472
        %v596 = vmul.f32 -0.5, %v565
        %v597 = vadd.f32 %v596, 1.0
        %v598 = vmul.f32 %v597, %v565
        %v599 = vand.u32 2147483647, %v565
        %vm600 = vcmp.lt.f32.partialorder %v599, 0.0004427343
        %v601 = vsel %vm600, %v598, %v595
        %v602 = vadd.f32 %v546, %v574
        %v603 = vadd.f32 %v547, %v583
        %v604 = vadd.f32 %v548, %v592
        %v605 = vadd.f32 %v549, %v601
        %v606 = vmul.f32 %v541, %v602
        %v607 = vmul.f32 %v542, %v603
        %v608 = vmul.f32 %v543, %v604
        %v609 = vmul.f32 %v544, %v605
        %v610 = vadd.f32 %v530, %v606
        %v611 = vadd.f32 %v531, %v607
        %v612 = vadd.f32 %v532, %v608
        %v613 = vadd.f32 %v533, %v609
        %v614 = vmax.f32 %v539, 0.0
        %v615 = vand.u32 2147483647, %v539
        %v616 = vsub.f32 0.0, %v615
        %v617 = vmul.f32 %v616, 1.442695
        %v618 = vpow.pop %v617
        %v619 = vadd.f32 %v618, 1.0
        %v620 = vlog2.pop %v619
        %v621 = vmul.f32 %v620, 0.6931472
        %v622 = vmul.f32 -0.5, %v618
        %v623 = vadd.f32 %v622, 1.0
        %v624 = vmul.f32 %v623, %v618
        %v625 = vand.u32 2147483647, %v618
        %vm626 = vcmp.lt.f32.partialorder %v625, 0.0004427343
        %v627 = vsel %vm626, %v624, %v621
        %v628 = vadd.f32 %v614, %v627
        %v629 = vmul.f32 %v545, %v628
        %v630 = vadd.f32 %v538, %v629
        %v631 = vlaneseq
        %v632 = vshrl.u32 %v631, 7
        %v633 = vsub.s32 0, %v632
        %v634 = vrot.slane %v630, %v633
        %v636 = vsel %vm274, %v528, 0
        %638 = vmatprep.subr.mxu0 0.0
        %639 = vmatpush1.msra.mxu0 %v610
        %640 = vmatprep.subr.mxu0 0.0
        %641 = vmatpush1.msra.mxu0 %v611
        %642 = vmatprep.subr.mxu0 0.0
        %643 = vmatpush1.msra.mxu0 %v612
        %644 = vmatprep.subr.mxu0 0.0
        %645 = vmatpush1.msra.mxu0 %v613
        %646 = vmatprep.subr.mxu0 0.0
        %647 = vmatpush1.msra.mxu0 0.0
        %648 = vmatprep.subr.mxu0 0.0
        %649 = vmatpush1.msra.mxu0 0.0
        %650 = vmatprep.subr.mxu0 0.0
        %651 = vmatpush1.msra.mxu0 0.0
        %652 = vmatprep.subr.mxu0 0.0
        %653 = vmatpush1.msra.mxu0 0.0
        %654 = vmatprep.subr.mxu0 0.0
        %655 = vmatpush1.msra.mxu0 0.0
        %656 = vmatprep.subr.mxu0 0.0
        %657 = vmatpush1.msra.mxu0 0.0
        %658 = vmatprep.subr.mxu0 0.0
        %659 = vmatpush1.msra.mxu0 0.0
        %660 = vmatprep.subr.mxu0 0.0
        %661 = vmatpush1.msra.mxu0 0.0
        %662 = vmatprep.subr.mxu0 0.0
        %663 = vmatpush1.msra.mxu0 0.0
        %664 = vmatprep.subr.mxu0 0.0
        %665 = vmatpush1.msra.mxu0 0.0
        %666 = vmatprep.subr.mxu0 0.0
        %667 = vmatpush1.msra.mxu0 0.0
        %668 = vmatprep.subr.mxu0 0.0
        %669 = vmatpush1.msra.mxu0 0.0
        %670 = vmatprep.subr.mxu0 0.0
        %671 = vmatpush1.msra.mxu0 0.0
        %672 = vmatprep.subr.mxu0 0.0
        %673 = vmatpush1.msra.mxu0 0.0
        %674 = vmatprep.subr.mxu0 0.0
        %675 = vmatpush1.msra.mxu0 0.0
        %676 = vmatprep.subr.mxu0 0.0
        %677 = vmatpush1.msra.mxu0 0.0
        %678 = vmatprep.subr.mxu0 0.0
        %679 = vmatpush1.msra.mxu0 0.0
        %680 = vmatprep.subr.mxu0 0.0
        %681 = vmatpush1.msra.mxu0 0.0
        %682 = vmatprep.subr.mxu0 0.0
        %683 = vmatpush1.msra.mxu0 0.0
        %684 = vmatprep.subr.mxu0 0.0
        %685 = vmatpush1.msra.mxu0 0.0
        %686 = vmatprep.subr.mxu0 0.0
        %687 = vmatpush1.msra.mxu0 0.0
        %688 = vmatprep.subr.mxu0 0.0
        %689 = vmatpush1.msra.mxu0 0.0
        %690 = vmatprep.subr.mxu0 0.0
        %691 = vmatpush1.msra.mxu0 0.0
        %692 = vmatprep.subr.mxu0 0.0
        %693 = vmatpush1.msra.mxu0 0.0
        %694 = vmatprep.subr.mxu0 0.0
        %695 = vmatpush1.msra.mxu0 0.0
        %696 = vmatprep.subr.mxu0 0.0
        %697 = vmatpush1.msra.mxu0 0.0
        %698 = vmatprep.subr.mxu0 0.0
        %699 = vmatpush1.msra.mxu0 0.0
        %700 = vmatprep.subr.mxu0 0.0
        %701 = vmatpush1.msra.mxu0 0.0
        %702 = vmatprep.mubr.f32.mxu0 0.0
        %703 = vmatmul.mubr.f32.gmra.mrb[0].mxu0 %v636
        %v704 = vpop.f32.mrb[0].mxu0
        %v705 = vadd.f32 %v634, %v704
        %v706 = vpop.f32.mrb[0].mxu0
        %707 = vdwg.mxu0
        %v708 = vmax.f32 %v705, 0.0
        %vm709 = vcmask 130048
        %v710 = vsel %vm709, %v708, -inf
        %711 = vmax.xlane.f32.xlu0 %v710
        %v712 = vpop.xlane.xlu0 %711
        %v713 = vsub.f32 %v708, %v712
        %v714 = vmul.f32 %v713, 1.442695
        %v715 = vpow.pop %v714
        %v716 = vsel %vm709, %v715, 0.0
        %717 = vadd.xlane.f32.xlu0 %v716
        %v718 = vpop.xlane.xlu0 %717
        %v719 = vlog2.pop %v718
        %v720 = vmul.f32 %v719, 0.6931472
        %v721 = vsub.f32 %v713, %v720
        %722 = vst.msk [vmem:[%s163] sm:$0xff] %vm709, %v721
        %s723 = sand.u32 %s93, 1
        %s724 = scalar_lea.sflag [#allocation3], %s723
        %s725 = sand.u32 %s93, 1
        %s726 = smul.addr %s725, 8
        %s727 = scalar_lea.vmem [#allocation2], %s726
        // Predicated region
        $region33: #{tpu_custom_call.1} parent=31 // pred_check
          %p728 = pneg %p103
        $region34: #{tpu_custom_call.1} parent=31 // pred_check_branch
          %730 = sbr.rel (%p728) target = $region36
        $region35: #{tpu_custom_call.1} parent=31 // pred_region
          %s732 = ssub.s32 128, 128
          %733 = vsyncadd %s724, %s732
          %s734 = smul.addr %s17, 128
          %s735 = scalar_lea.hbm %s3, %s734
          %s737 = sshll.u32 %s727, 4
          %s738 = int_to_ptr.vmem [resolvable:$true] %s737
          %740 = dma.vmem_to_hbm [thread:$0]  %s738, 128, %s735, %s724
        $region36: #{tpu_custom_call.1} parent=31 // pred_fallthru
          _
      $region32: #{tpu_custom_call.1} parent=5 // pred_fallthru
        _
      %p741 = scmp.le.s32.totalorder 2, %s12
      // Predicated region
      $region37: #{tpu_custom_call.1} parent=5 // pred_check
        %p742 = pneg %p741
      $region38: #{tpu_custom_call.1} parent=5 // pred_check_branch
        %744 = sbr.rel (%p742) target = $region40
      $region39: #{tpu_custom_call.1} parent=5 // pred_region
        %s745 = ssub.s32 %s12, 2
        // Predicated region
        $region41: #{tpu_custom_call.1} parent=39 // pred_check
          %p746 = pneg %p109
        $region42: #{tpu_custom_call.1} parent=39 // pred_check_branch
          %748 = sbr.rel (%p746) target = $region44
        $region43: #{tpu_custom_call.1} parent=39 // pred_region
          %s749 = sand.u32 %s94, 1
          %s750 = scalar_lea.sflag [#allocation3], %s749
          %s751 = sand.u32 %s94, 1
          %s752 = smul.addr %s751, 8
          %s753 = scalar_lea.vmem [#allocation2], %s752
          %754 = dma.done %s750, 128
        $region44: #{tpu_custom_call.1} parent=39 // pred_fallthru
          _
      $region40: #{tpu_custom_call.1} parent=5 // pred_fallthru
        _
    $region6: #{tpu_custom_call.1} parent=1 // loop_footer
      %s16 = sadd.s32 1, %s12
    $region7: #{tpu_custom_call.1} parent=1 // loop_footer_branch
      %11 = sbr.rel target = $region3
    $region8: #{tpu_custom_call.1} parent=1 // loop_exit
      _
    %755 = vsyncpa [#allocation3], 1
    %s756 = scalar_lea.sflag [#allocation3], 1
    %757 = vsyncpa %s756, 1

</llo_original>
